<compile_context>
chip_gen: v7x
topology: tpu7x:2x2x1
jax: 0.10.0
libtpu: 0.0.40
codegen_flags: <defaults>
</compile_context>

<pallas_src>
import functools
import math

import jax
import jax.numpy as jnp
from jax.experimental import pallas as pl
from jax.experimental.pallas import tpu as pltpu


# ---------------------------------------------------------------------------
# Activations (f32 math inside the kernel)
# ---------------------------------------------------------------------------
_SQRT_2_OVER_PI = 0.7978845608028654


def _gelu_tanh(x):
    return 0.5 * x * (1.0 + jnp.tanh(_SQRT_2_OVER_PI * (x + 0.044715 * x * x * x)))


def _relu(x):
    return jnp.maximum(x, 0.0)


ACT2FN = {"gelu": _gelu_tanh, "gelu_new": _gelu_tanh, "relu": _relu}


# ---------------------------------------------------------------------------
# Small helpers
# ---------------------------------------------------------------------------
def _cdiv(a, b):
    return (a + b - 1) // b


def _round_up(x, m):
    return ((x + m - 1) // m) * m


def _vmem_capacity_bytes():
    try:
        return int(pltpu.get_tpu_info().vmem_capacity_bytes)
    except Exception:
        return 64 * 1024 * 1024          # conservative (v7x per-core VMEM)


def _choose_row_tile(m, per_row_bytes, fixed_bytes, budget_bytes, tm_max):
    """Row tile: as big as VMEM allows, but keep >=2 (ideally >=4) grid steps."""
    m_pad = _round_up(max(m, 8), 8)
    avail = max(budget_bytes - fixed_bytes, 0)
    tm = min(tm_max, max(8, avail // max(per_row_bytes, 1)))
    if m_pad >= 4 * 128:
        # enough rows: keep >=4 steps so 'parallel' shards across 2 TCs (v7x)
        tm = min(tm, max(128, _round_up(_cdiv(m_pad, 4), 128)))
    elif m_pad >= 16:
        tm = min(tm, max(8, _round_up(_cdiv(m_pad, 2), 8)))
    tm = min(tm, m_pad)
    if tm >= 128:
        tm = (tm // 128) * 128           # MXU-friendly row count
    else:
        tm = max(8, (tm // 8) * 8)
    return int(tm)


# ---------------------------------------------------------------------------
# Kernel bodies
# ---------------------------------------------------------------------------
def _resident_kernel(x_ref, w_ref, b_ref, o_ref, *, groups, gi, go, act_fn):
    # x_ref : (tm, hidden)        bf16
    # w_ref : (G, gi, go)         bf16 (resident, matmul-ready)
    # b_ref : (1, intermediate)   f32
    # o_ref : (tm, intermediate)  bf16
    for g in range(groups):                              # static, small
        # per-group ref read: bounds vreg live ranges, overlaps next load
        xg = x_ref[:, g * gi:(g + 1) * gi]
        yg = jnp.dot(xg, w_ref[g], preferred_element_type=jnp.float32)
        yg = yg + b_ref[:, g * go:(g + 1) * go]
        o_ref[:, g * go:(g + 1) * go] = act_fn(yg).astype(o_ref.dtype)


def _coltile_kernel(x_ref, w_ref, b_ref, o_ref, *, act_fn):
    # x_ref : (tm, gi)   bf16 (group slice selected by BlockSpec)
    # w_ref : (1, gi, tn) bf16
    # b_ref : (1, tn)     f32
    # o_ref : (tm, tn)    bf16
    y = jnp.dot(x_ref[...], w_ref[0], preferred_element_type=jnp.float32)
    y = y + b_ref[...]
    o_ref[...] = act_fn(y).astype(o_ref.dtype)


# ---------------------------------------------------------------------------
# Fused (grouped) dense + activation
# ---------------------------------------------------------------------------
def grouped_dense_act(x2d, weight, bias2d, act_fn, *,
                      force_column_tiling=False, col_tile_cap=1024):
    """x2d (M, hidden) bf16, weight (G, gi, go) bf16, bias2d (1, inter) f32
       -> (M, inter) bf16."""
    m, hid = x2d.shape
    groups, gi, go = weight.shape
    inter = groups * go
    assert groups * gi == hid

    cap = _vmem_capacity_bytes()
    vmem_limit = int(cap * 0.75)
    budget = int(vmem_limit * 0.8)
    tm_max = 1024 if cap >= 100 * 1024 * 1024 else 512     # 512 on 64-MiB v7x

    w_bytes = weight.size * weight.dtype.itemsize
    b_bytes = bias2d.size * bias2d.dtype.itemsize
    cost = pl.CostEstimate(
        flops=2 * m * hid * go,                 # = 2*M*hid*inter/groups
        transcendentals=m * inter,              # one tanh per output element
        bytes_accessed=x2d.size * 2 + w_bytes + b_bytes + m * inter * 2)

    # --- path selection -----------------------------------------------------
    res_fixed = 2 * w_bytes + 2 * b_bytes              # double-buffered residents
    res_per_row = 2 * 2 * hid + 2 * 2 * inter          # bf16 x + bf16 out, dbl-buf
    resident_ok = (budget - res_fixed) >= res_per_row * min(128, _round_up(m, 8))
    col_aligned = (groups == 1) or (gi % 128 == 0 and go % 128 == 0)

    if (resident_ok and not force_column_tiling) or not col_aligned:
        # ---- resident-weight path (typical ConvBERT sizes) ------------------
        tm = _choose_row_tile(m, res_per_row, res_fixed, budget, tm_max)
        kern = functools.partial(_resident_kernel, groups=groups, gi=gi, go=go,
                                 act_fn=act_fn)
        return pl.pallas_call(
            kern,
            out_shape=jax.ShapeDtypeStruct((m, inter), jnp.bfloat16),
            grid_spec=pltpu.PrefetchScalarGridSpec(
                num_scalar_prefetch=0,
                grid=(_cdiv(m, tm),),
                in_specs=[
                    pl.BlockSpec((tm, hid), lambda i: (i, 0)),
                    pl.BlockSpec((groups, gi, go), lambda i: (0, 0, 0)),
                    pl.BlockSpec((1, inter), lambda i: (0, 0)),
                ],
                out_specs=pl.BlockSpec((tm, inter), lambda i: (i, 0)),
            ),
            compiler_params=pltpu.CompilerParams(
                dimension_semantics=("parallel",),
                vmem_limit_bytes=vmem_limit),
            cost_estimate=cost,
        )(x2d, weight, bias2d)

    # ---- column-tiled path (large weights / forced) --------------------------
    # Column tile within a group: largest multiple of 128 dividing go (<= cap).
    tn = go
    if go % 128 == 0:
        for cand in range(min(go, col_tile_cap), 0, -128):
            if go % cand == 0:
                tn = cand
                break
    cb = go // tn                      # column blocks per group
    ncols = groups * cb

    col_fixed = 2 * (gi * tn * 2) + 2 * (tn * 4)
    col_per_row = 2 * 2 * gi + 2 * 2 * tn
    tm = _choose_row_tile(m, col_per_row, col_fixed, budget, tm_max)
    kern = functools.partial(_coltile_kernel, act_fn=act_fn)

    # Columns are the OUTER grid axis: each weight block is fetched exactly once
    # from HBM; x blocks are re-streamed per column block (x << weight here).
    def x_map(j, i):
        return (i, j // cb)

    def w_map(j, i):
        return (j // cb, 0, j % cb)

    def b_map(j, i):
        return (0, j)

    def o_map(j, i):
        return (i, j)

    return pl.pallas_call(
        kern,
        out_shape=jax.ShapeDtypeStruct((m, inter), jnp.bfloat16),
        grid_spec=pltpu.PrefetchScalarGridSpec(
            num_scalar_prefetch=0,
            grid=(ncols, _cdiv(m, tm)),
            in_specs=[
                pl.BlockSpec((tm, gi), x_map),
                pl.BlockSpec((1, gi, tn), w_map),
                pl.BlockSpec((1, tn), b_map),
            ],
            out_specs=pl.BlockSpec((tm, tn), o_map),
        ),
        compiler_params=pltpu.CompilerParams(
            dimension_semantics=("arbitrary", "parallel"),
            vmem_limit_bytes=vmem_limit),
        cost_estimate=cost,
    )(x2d, weight, bias2d)


# ---------------------------------------------------------------------------
# Module wrapper
# ---------------------------------------------------------------------------
class ConvBertIntermediatePallas:
    def __init__(self, hidden_size, intermediate_size, linear_groups=1,
                 hidden_act="gelu", *, key, force_column_tiling=False,
                 col_tile_cap=1024):
        assert hidden_size % linear_groups == 0
        assert intermediate_size % linear_groups == 0
        self.hidden_size = hidden_size
        self.intermediate_size = intermediate_size
        self.groups = linear_groups
        gi = hidden_size // linear_groups
        go = intermediate_size // linear_groups

        kw, kb = jax.random.split(key)
        bound = 1.0 / math.sqrt(gi if linear_groups > 1 else hidden_size)
        # Weight stored once in matmul-ready (G, gi, go) layout, bf16 for the MXU
        # (nn.Linear's (out, in) weight is pre-transposed; GLinear already is).
        w_f32 = jax.random.uniform(
            kw, (linear_groups, gi, go), jnp.float32, -bound, bound)
        self.weight = w_f32.astype(jnp.bfloat16)            # kernel operand
        self.weight_f32 = self.weight.astype(jnp.float32)   # for reference check
        self.bias = jax.random.uniform(
            kb, (intermediate_size,), jnp.float32, -bound, bound)
        self.bias2d = self.bias.reshape(1, intermediate_size)
        self.act_fn = ACT2FN[hidden_act] if isinstance(hidden_act, str) else hidden_act
        self._force_col = force_column_tiling
        self._col_cap = col_tile_cap

    def __call__(self, hidden_states):
        b, s, h = hidden_states.shape
        # Stream activations in bf16 (in a full model the producer already emits bf16).
        x2d = hidden_states.reshape(b * s, h).astype(jnp.bfloat16)
        y2d = grouped_dense_act(x2d, self.weight, self.bias2d, self.act_fn,
                                force_column_tiling=self._force_col,
                                col_tile_cap=self._col_cap)
        return y2d.reshape(b, s, self.intermediate_size)


# ---------------------------------------------------------------------------
# Pure-JAX reference (f32 math on the same bf16-quantized operands)
# ---------------------------------------------------------------------------
def reference_forward(mod, hidden_states):
    b, s, h = hidden_states.shape
    groups, gi, go = mod.weight_f32.shape
    x = hidden_states.reshape(b * s, h).astype(jnp.bfloat16).astype(jnp.float32)
    x = x.reshape(b * s, groups, gi)
    y = jnp.einsum("mgi,gio->mgo", x, mod.weight_f32,
                   precision=jax.lax.Precision.HIGHEST)
    y = y.reshape(b * s, groups * go) + mod.bias
    y = mod.act_fn(y)
    return y.reshape(b, s, groups * go)


def _check(mod, x, name):
    out = jax.block_until_ready(mod(x))
    ref = reference_forward(mod, x)
    assert out.shape == ref.shape, f"{name}: shape mismatch {out.shape} vs {ref.shape}"
    assert jnp.allclose(out.astype(jnp.float32), ref, atol=3e-2, rtol=3e-2), \
        f"{name}: value mismatch"


if __name__ == "__main__":
    B, S = 2, 8
    root = jax.random.PRNGKey(0)
    kx1, kx2, k1, k2, k3, k4 = jax.random.split(root, 6)

    x32 = jax.random.normal(kx1, (B, S, 32), jnp.float32)
    x256 = jax.random.normal(kx2, (B, S, 256), jnp.float32)

    # A: linear_groups = 1 (nn.Linear path), resident-weight kernel
    modA = ConvBertIntermediatePallas(32, 128, linear_groups=1, hidden_act="gelu", key=k1)
    _check(modA, x32, "A(groups=1,resident)")

    # B: linear_groups = 2 (GLinear path), resident-weight kernel (misaligned groups)
    modB = ConvBertIntermediatePallas(32, 128, linear_groups=2, hidden_act="gelu", key=k2)
    _check(modB, x32, "B(groups=2,resident)")

    # C: column-tiled path exercised (forced) with multiple column blocks
    modC = ConvBertIntermediatePallas(32, 256, linear_groups=1, hidden_act="gelu",
                                      key=k3, force_column_tiling=True, col_tile_cap=128)
    _check(modC, x32, "C(groups=1,column)")

    # D: grouped column-tiled path (group selection via BlockSpec index_map)
    modD = ConvBertIntermediatePallas(256, 256, linear_groups=2, hidden_act="gelu",
                                      key=k4, force_column_tiling=True)
    _check(modD, x256, "D(groups=2,column)")

    print("KERNEL_OK")
</pallas_src>

<mosaic_0001>
module attributes {stable_mosaic.version = 11 : i64} {
  func.func @_resident_kernel(%arg0: i32, %arg1: memref<8x32xbf16, #tpu.memory_space<vmem>>, %arg2: memref<1x32x128xbf16, #tpu.memory_space<vmem>>, %arg3: memref<1x128xf32, #tpu.memory_space<vmem>>, %arg4: memref<8x128xbf16, #tpu.memory_space<vmem>>) attributes {dimension_semantics = [#tpu.dimension_semantics<parallel>], iteration_bounds = array<i64: 2>, scalar_prefetch = 0 : i64, scratch_operands = 0 : i64, tpu.core_type = #tpu.core_type<tc>, window_params = [{transform_indices = @transform_0, window_bounds = array<i64: 8, 32>}, {pipeline_mode = #tpu.pipeline_mode<synchronous>, transform_indices = @transform_1, window_bounds = array<i64: 1, 32, 128>}, {pipeline_mode = #tpu.pipeline_mode<synchronous>, transform_indices = @transform_2, window_bounds = array<i64: 1, 128>}, {transform_indices = @transform_3, window_bounds = array<i64: 8, 128>}]} {
    %c0 = arith.constant 0 : index
    %c0_0 = arith.constant 0 : index
    %0 = vector.load %arg1[%c0, %c0_0] : memref<8x32xbf16, #tpu.memory_space<vmem>>, vector<8x32xbf16>
    %c0_1 = arith.constant 0 : index
    %c0_2 = arith.constant 0 : index
    %c0_3 = arith.constant 0 : index
    %1 = vector.load %arg2[%c0_1, %c0_2, %c0_3] : memref<1x32x128xbf16, #tpu.memory_space<vmem>>, vector<1x32x128xbf16>
    %2 = vector.shape_cast %1 : vector<1x32x128xbf16> to vector<32x128xbf16>
    %cst = arith.constant dense<0.000000e+00> : vector<8x128xf32>
    %3 = tpu.matmul %0, %2, %cst {dimension_numbers = #tpu.dot_dimension_numbers<[1], [0], [0], [1], [0, 0, 1, 1], [], []>} : vector<8x32xbf16>, vector<32x128xbf16>, vector<8x128xf32> -> vector<8x128xf32>
    %c0_4 = arith.constant 0 : index
    %c0_5 = arith.constant 0 : index
    %4 = vector.load %arg3[%c0_4, %c0_5] : memref<1x128xf32, #tpu.memory_space<vmem>>, vector<1x128xf32>
    %5 = vector.broadcast %4 : vector<1x128xf32> to vector<8x128xf32>
    %6 = arith.addf %3, %5 : vector<8x128xf32>
    %cst_6 = arith.constant 5.000000e-01 : f32
    %7 = vector.broadcast %cst_6 : f32 to vector<8x128xf32>
    %8 = arith.mulf %7, %6 : vector<8x128xf32>
    %cst_7 = arith.constant 4.471500e-02 : f32
    %9 = vector.broadcast %cst_7 : f32 to vector<8x128xf32>
    %10 = arith.mulf %9, %6 : vector<8x128xf32>
    %11 = arith.mulf %10, %6 : vector<8x128xf32>
    %12 = arith.mulf %11, %6 : vector<8x128xf32>
    %13 = arith.addf %6, %12 : vector<8x128xf32>
    %cst_8 = arith.constant 0.797884583 : f32
    %14 = vector.broadcast %cst_8 : f32 to vector<8x128xf32>
    %15 = arith.mulf %14, %13 : vector<8x128xf32>
    %16 = math.tanh %15 : vector<8x128xf32>
    %cst_9 = arith.constant 1.000000e+00 : f32
    %17 = vector.broadcast %cst_9 : f32 to vector<8x128xf32>
    %18 = arith.addf %17, %16 : vector<8x128xf32>
    %19 = arith.mulf %8, %18 : vector<8x128xf32>
    %20 = arith.truncf %19 : vector<8x128xf32> to vector<8x128xbf16>
    %c0_10 = arith.constant 0 : index
    %c0_11 = arith.constant 0 : index
    %21 = vector.load %arg4[%c0_10, %c0_11] : memref<8x128xbf16, #tpu.memory_space<vmem>>, vector<8x128xbf16>
    tpu.vector_store %arg4[%c0_10, %c0_11], %20 {strides = array<i32>} : memref<8x128xbf16, #tpu.memory_space<vmem>>, vector<8x128xbf16>,
    return
  }
  func.func @transform_0(%arg0: i32) -> (i32, i32) {
    %c0_i32 = arith.constant 0 : i32
    %c0_i32_0 = arith.constant 0 : i32
    return %arg0, %c0_i32 : i32, i32
  }
  func.func @transform_1(%arg0: i32) -> (i32, i32, i32) {
    %c0_i32 = arith.constant 0 : i32
    %c0_i32_0 = arith.constant 0 : i32
    %c0_i32_1 = arith.constant 0 : i32
    %c0_i32_2 = arith.constant 0 : i32
    return %c0_i32, %c0_i32_0, %c0_i32_1 : i32, i32, i32
  }
  func.func @transform_2(%arg0: i32) -> (i32, i32) {
    %c0_i32 = arith.constant 0 : i32
    %c0_i32_0 = arith.constant 0 : i32
    %c0_i32_1 = arith.constant 0 : i32
    return %c0_i32, %c0_i32_0 : i32, i32
  }
  func.func @transform_3(%arg0: i32) -> (i32, i32) {
    %c0_i32 = arith.constant 0 : i32
    %c0_i32_0 = arith.constant 0 : i32
    return %arg0, %c0_i32 : i32, i32
  }
}

</mosaic_0001>

<llo_original>
// kernel: tpu_custom_call.1
$region0: #{tpu_custom_call.1}
  #allocation0 [shape = 'u32[]', space=smem, size = 0x4, offset = 0x4, fixed_abs, tag = 'smem constant byte address 0x4 - core index']
  #allocation1 [shape = 'u32[144,128]{1,0:T(1,128)}', space=vmem, size = 0x12000, scoped, tag = 'internal scratch']
  %s0 = inlined_call_operand.hbm [shape: bf16[16,32], index: 0, kind: input, shape index: {}]
  %s1 = inlined_call_operand.hbm [shape: bf16[1,32,128], index: 1, kind: input, shape index: {}]
  %s2 = inlined_call_operand.vmem [shape: f32[1,128], index: 2, kind: input, shape index: {}]
  %s3 = inlined_call_operand.hbm [shape: bf16[16,128], index: 3, kind: output, shape index: {}]
  %s4 = sld [smem:[#allocation0]]
  $region53: #{tpu_custom_call.1} parent=0
    _
  %s6 = ssub.s32 1, %s4
  %s7 = scalar_select 0, %s6, %s4
  $region1: #{tpu_custom_call.1} parent=0
    #allocation2 [shape = 'u8[4096]{0}', space=vmem, size = 0x1000, scoped, tag = 'input window, operand 0']
    #allocation3 [shape = 's32[2]{0}', space=sflag, size = 0x8, scoped, tag = 'scoped memory for tpu_custom_call.1']
    #allocation4 [shape = 's32[2]{0}', space=sflag, size = 0x8, scoped, tag = 'scoped memory for tpu_custom_call.1']
    #allocation5 [shape = 'u8[8192]{0}', space=vmem, size = 0x2000, scoped, tag = 'input window, operand 1, single buffered']
    #allocation6 [shape = 's32[1]{0}', space=sflag, size = 0x4, scoped, tag = 'scoped memory for tpu_custom_call.1']
    #allocation7 [shape = 'u8[4096]{0}', space=vmem, size = 0x1000, scoped, tag = 'output window, operand 0']
    %8 = vsyncpa [#allocation3], 0
    %s9 = scalar_lea.sflag [#allocation3], 1
    %10 = vsyncpa %s9, 0
    %11 = vsyncpa [#allocation6], 0
    %12 = vsyncpa [#allocation4], 0
    %s13 = scalar_lea.sflag [#allocation4], 1
    %14 = vsyncpa %s13, 0
    loop: start=0, step=1, limit=4
    $region2: #{tpu_custom_call.1} parent=1 // loop_pre_header
      _
    $region3: #{tpu_custom_call.1} parent=1 // loop_header
      %s16 = sphi 0, %s20
      %p17 = scmp.ge.s32.totalorder %s16, 4
      %s26 = sphi 0, %s28
      %s29 = sphi 0, %s26
      %s30 = sphi 0, %s29
      %s46 = sphi 0, %s30
      %s50 = sphi 0, %s50
      %s52 = sphi 0, %s50
      %s53 = sphi 0, %s52
      %s67 = sphi 0, %s53
      %s71 = sphi 0, %s71
      %s73 = sphi 0, %s71
      %s74 = sphi 0, %s73
      %s88 = sphi 0, %s74
      %s94 = sphi 0, %s96
      %s97 = sphi 0, %s94
      %s98 = sphi 0, %s97
      %s114 = sphi 0, %s98
    $region4: #{tpu_custom_call.1} parent=1 // loop_header_branch
      %19 = sbr.rel (%p17) target = $region8
    $region5: #{tpu_custom_call.1} parent=1 // loop_body
      %s21 = ssub.s32 %s16, 1
      %s22 = ssub.s32 %s16, 2
      %s23 = sadd.s32 %s16, 1
      %s24 = ssub.s32 %s16, %s23
      %p25 = scmp.eq.s32.totalorder %s24, 0
      %s27 = sadd.s32 %s26, 1
      %s28 = scalar_select %p25, %s26, %s27
      %p31 = pneg %p25
      %p32 = scmp.eq.s32.totalorder %s16, 1
      %p33 = por %p31, %p32
      %p34 = scmp.ne.s32.totalorder %s26, %s29
      %p35 = scmp.eq.s32.totalorder %s16, 0
      %p36 = por %p34, %p35
      %p37 = scmp.ne.s32.totalorder %s26, %s29
      %p38 = scmp.eq.s32.totalorder %s21, 1
      %p39 = por %p37, %p38
      %p40 = scmp.ne.s32.totalorder %s29, %s30
      %p41 = scmp.eq.s32.totalorder %s21, 0
      %p42 = por %p40, %p41
      %p43 = scmp.ne.s32.totalorder %s29, %s30
      %p44 = scmp.eq.s32.totalorder %s22, 1
      %p45 = por %p43, %p44
      %p47 = scmp.ne.s32.totalorder %s30, %s46
      %p48 = scmp.eq.s32.totalorder %s22, 0
      %p49 = por %p47, %p48
      %s51 = sadd.s32 %s50, 1
      %p54 = scmp.eq.s32.totalorder %s16, 1
      %p55 = scmp.ne.s32.totalorder %s50, %s52
      %p56 = scmp.eq.s32.totalorder %s16, 0
      %p57 = por %p55, %p56
      %p58 = scmp.ne.s32.totalorder %s50, %s52
      %p59 = scmp.eq.s32.totalorder %s21, 1
      %p60 = por %p58, %p59
      %p61 = scmp.ne.s32.totalorder %s52, %s53
      %p62 = scmp.eq.s32.totalorder %s21, 0
      %p63 = por %p61, %p62
      %p64 = scmp.ne.s32.totalorder %s52, %s53
      %p65 = scmp.eq.s32.totalorder %s22, 1
      %p66 = por %p64, %p65
      %p68 = scmp.ne.s32.totalorder %s53, %s67
      %p69 = scmp.eq.s32.totalorder %s22, 0
      %p70 = por %p68, %p69
      %s72 = sadd.s32 %s71, 1
      %p75 = scmp.eq.s32.totalorder %s16, 1
      %p76 = scmp.ne.s32.totalorder %s71, %s73
      %p77 = scmp.eq.s32.totalorder %s16, 0
      %p78 = por %p76, %p77
      %p79 = scmp.ne.s32.totalorder %s71, %s73
      %p80 = scmp.eq.s32.totalorder %s21, 1
      %p81 = por %p79, %p80
      %p82 = scmp.ne.s32.totalorder %s73, %s74
      %p83 = scmp.eq.s32.totalorder %s21, 0
      %p84 = por %p82, %p83
      %p85 = scmp.ne.s32.totalorder %s73, %s74
      %p86 = scmp.eq.s32.totalorder %s22, 1
      %p87 = por %p85, %p86
      %p89 = scmp.ne.s32.totalorder %s74, %s88
      %p90 = scmp.eq.s32.totalorder %s22, 0
      %p91 = por %p89, %p90
      %s92 = ssub.s32 %s16, %s23
      %p93 = scmp.eq.s32.totalorder %s92, 0
      %s95 = sadd.s32 %s94, 1
      %s96 = scalar_select %p93, %s94, %s95
      %p99 = pneg %p93
      %p100 = scmp.eq.s32.totalorder %s16, 1
      %p101 = por %p99, %p100
      %p102 = scmp.ne.s32.totalorder %s94, %s97
      %p103 = scmp.eq.s32.totalorder %s16, 0
      %p104 = por %p102, %p103
      %p105 = scmp.ne.s32.totalorder %s94, %s97
      %p106 = scmp.eq.s32.totalorder %s21, 1
      %p107 = por %p105, %p106
      %p108 = scmp.ne.s32.totalorder %s97, %s98
      %p109 = scmp.eq.s32.totalorder %s21, 0
      %p110 = por %p108, %p109
      %p111 = scmp.ne.s32.totalorder %s97, %s98
      %p112 = scmp.eq.s32.totalorder %s22, 1
      %p113 = por %p111, %p112
      %p115 = scmp.ne.s32.totalorder %s98, %s114
      %p116 = scmp.eq.s32.totalorder %s22, 0
      %p117 = por %p115, %p116
      %p118 = scmp.le.s32.totalorder 1, %s16
      %p119 = scmp.lt.s32.totalorder %s16, 3
      %p120 = pnand %p118, %p119
      %p121 = pneg %p120
      // Predicated region
      $region9: #{tpu_custom_call.1} parent=5 // pred_check
        _
      $region10: #{tpu_custom_call.1} parent=5 // pred_check_branch
        %123 = sbr.rel (%p120) target = $region12
      $region11: #{tpu_custom_call.1} parent=5 // pred_region
        %s124 = ssub.s32 %s16, 1
        // Predicated region
        $region13: #{tpu_custom_call.1} parent=11 // pred_check
          %p125 = pneg %p63
        $region14: #{tpu_custom_call.1} parent=11 // pred_check_branch
          %127 = sbr.rel (%p125) target = $region16
        $region15: #{tpu_custom_call.1} parent=11 // pred_region
          %s129 = ssub.s32 256, 256
          %130 = vsyncadd [#allocation6], %s129
          %s131 = sshll.u32 [#allocation5], 4
          %s132 = int_to_ptr.vmem [resolvable:$true] %s131
          %137 = dma.hbm_to_vmem [thread:$0]  %s1, 256, %s132, [#allocation6], 64, 64, 4
        $region16: #{tpu_custom_call.1} parent=11 // pred_fallthru
          _
        // Predicated region
        $region17: #{tpu_custom_call.1} parent=11 // pred_check
          %p138 = pneg %p84
        $region18: #{tpu_custom_call.1} parent=11 // pred_check_branch
          %140 = sbr.rel (%p138) target = $region20
        $region19: #{tpu_custom_call.1} parent=11 // pred_region
          _
        $region20: #{tpu_custom_call.1} parent=11 // pred_fallthru
          _
      $region12: #{tpu_custom_call.1} parent=5 // pred_fallthru
        _
      %p141 = scmp.lt.s32.totalorder %s16, 2
      // Predicated region
      $region21: #{tpu_custom_call.1} parent=5 // pred_check
        %p142 = pneg %p141
      $region22: #{tpu_custom_call.1} parent=5 // pred_check_branch
        %144 = sbr.rel (%p142) target = $region24
      $region23: #{tpu_custom_call.1} parent=5 // pred_region
        // Predicated region
        $region25: #{tpu_custom_call.1} parent=23 // pred_check
          %p145 = pneg %p36
        $region26: #{tpu_custom_call.1} parent=23 // pred_check_branch
          %147 = sbr.rel (%p145) target = $region28
        $region27: #{tpu_custom_call.1} parent=23 // pred_region
          %s148 = sand.u32 %s26, 1
          %s149 = scalar_lea.sflag [#allocation3], %s148
          %s150 = sand.u32 %s26, 1
          %s151 = smul.addr %s150, 4
          %s152 = scalar_lea.vmem [#allocation2], %s151
          %s154 = ssub.s32 64, 64
          %155 = vsyncadd %s149, %s154
          %s156 = smul.addr %s16, 64
          %s157 = scalar_lea.hbm %s0, %s156
          %s159 = sshll.u32 %s152, 4
          %s160 = int_to_ptr.vmem [resolvable:$true] %s159
          %162 = dma.hbm_to_vmem [thread:$0]  %s157, 64, %s160, %s149
        $region28: #{tpu_custom_call.1} parent=23 // pred_fallthru
          _
      $region24: #{tpu_custom_call.1} parent=5 // pred_fallthru
        _
      %p163 = scmp.le.s32.totalorder 1, %s16
      %p164 = scmp.lt.s32.totalorder %s16, 3
      %p165 = pnand %p163, %p164
      %p166 = pneg %p165
      // Predicated region
      $region29: #{tpu_custom_call.1} parent=5 // pred_check
        _
      $region30: #{tpu_custom_call.1} parent=5 // pred_check_branch
        %168 = sbr.rel (%p165) target = $region32
      $region31: #{tpu_custom_call.1} parent=5 // pred_region
        %s169 = ssub.s32 %s16, 1
        %s170 = sand.u32 %s29, 1
        %s171 = scalar_lea.sflag [#allocation3], %s170
        %s172 = sand.u32 %s29, 1
        %s173 = smul.addr %s172, 4
        %s174 = scalar_lea.vmem [#allocation2], %s173
        // Predicated region
        $region33: #{tpu_custom_call.1} parent=31 // pred_check
          %p175 = pneg %p42
        $region34: #{tpu_custom_call.1} parent=31 // pred_check_branch
          %177 = sbr.rel (%p175) target = $region36
        $region35: #{tpu_custom_call.1} parent=31 // pred_region
          %178 = dma.done %s171, 64
        $region36: #{tpu_custom_call.1} parent=31 // pred_fallthru
          _
        // Predicated region
        $region37: #{tpu_custom_call.1} parent=31 // pred_check
          %p179 = pneg %p63
        $region38: #{tpu_custom_call.1} parent=31 // pred_check_branch
          %181 = sbr.rel (%p179) target = $region40
        $region39: #{tpu_custom_call.1} parent=31 // pred_region
          %182 = dma.done [#allocation6], 256
        $region40: #{tpu_custom_call.1} parent=31 // pred_fallthru
          _
        %s183 = sand.u32 %s29, 1
        %s184 = scalar_lea.sflag [#allocation3], %s183
        %s185 = sand.u32 %s29, 1
        %s186 = smul.addr %s185, 4
        %s187 = scalar_lea.vmem [#allocation2], %s186
        %p188 = pneg %p42
        %p189 = pneg %p39
        %p190 = pneg %p63
        %p191 = pneg %p60
        %p192 = pneg %p84
        %p193 = pneg %p81
        %p194 = pneg %p110
        %p195 = pneg %p107
        %s196 = sand.u32 %s97, 1
        %s197 = scalar_lea.sflag [#allocation4], %s196
        %s198 = sand.u32 %s97, 1
        %s199 = smul.addr %s198, 4
        %s200 = scalar_lea.vmem [#allocation7], %s199
        %v202 = vld [vmem:[%s174] sm:$0xf]
        %v203 = vld [vmem:[#allocation5] sm:$0xf]
        %v204 = vld [vmem:[#allocation5 + $0x4] sm:$0xf]
        %v205 = vld [vmem:[#allocation5 + $0x8] sm:$0xf]
        %v206 = vld [vmem:[#allocation5 + $0xc] sm:$0xf]
        %v207 = vld [vmem:[%s2] sm:$0x1]
        %v209 = vlaneseq
        %v210 = vshrl.u32 %v209, 7
        %v211 = vsub.s32 0, %v210
        %v212 = vrot.slane %v207, %v211
        %v218 = vunpack.c.l.b16 %v203
        %v219 = vunpack.c.l.b16 %v204
        %v220 = vunpack.c.l.b16 %v205
        %v221 = vunpack.c.l.b16 %v206
        %v222 = vpack.c.b16 %v219, %v218
        %v223 = vpack.c.b16 %v221, %v220
        %vm226 = vcmask 261120
        %v228 = vsel %vm226, %v202, 0
        %230 = vmatprep.subr.bf16.mxu0 0
        %231 = vmatpush1.bf16.msra.mxu0 %v222
        %232 = vmatprep.subr.bf16.mxu0 0
        %233 = vmatpush1.bf16.msra.mxu0 %v223
        %234 = vmatprep.subr.bf16.mxu0 0
        %235 = vmatpush1.bf16.msra.mxu0 0
        %236 = vmatprep.subr.bf16.mxu0 0
        %237 = vmatpush1.bf16.msra.mxu0 0
        %238 = vmatprep.subr.bf16.mxu0 0
        %239 = vmatpush1.bf16.msra.mxu0 0
        %240 = vmatprep.subr.bf16.mxu0 0
        %241 = vmatpush1.bf16.msra.mxu0 0
        %242 = vmatprep.subr.bf16.mxu0 0
        %243 = vmatpush1.bf16.msra.mxu0 0
        %244 = vmatprep.subr.bf16.mxu0 0
        %245 = vmatpush1.bf16.msra.mxu0 0
        %246 = vmatprep.subr.bf16.mxu0 0
        %247 = vmatpush1.bf16.msra.mxu0 0
        %248 = vmatprep.subr.bf16.mxu0 0
        %249 = vmatpush1.bf16.msra.mxu0 0
        %250 = vmatprep.subr.bf16.mxu0 0
        %251 = vmatpush1.bf16.msra.mxu0 0
        %252 = vmatprep.subr.bf16.mxu0 0
        %253 = vmatpush1.bf16.msra.mxu0 0
        %254 = vmatprep.subr.bf16.mxu0 0
        %255 = vmatpush1.bf16.msra.mxu0 0
        %256 = vmatprep.subr.bf16.mxu0 0
        %257 = vmatpush1.bf16.msra.mxu0 0
        %258 = vmatprep.subr.bf16.mxu0 0
        %259 = vmatpush1.bf16.msra.mxu0 0
        %260 = vmatprep.subr.bf16.mxu0 0
        %261 = vmatpush1.bf16.msra.mxu0 0
        %262 = vmatprep.mubr.bf16.mxu0 0
        %263 = vmatmul.mubr.bf16.gmra.mrb[0].mxu0 %v228
        %v264 = vpop.f32.mrb[0].mxu0
        %v265 = vadd.f32 %v212, %v264
        %v266 = vpop.f32.mrb[0].mxu0
        %v267 = vpop.f32.mrb[0].mxu0
        %v268 = vpop.f32.mrb[0].mxu0
        %269 = vdwg.mxu0
        %v270 = vmul.f32 %v265, 0.5
        %v271 = vmul.f32 %v265, 0.044715
        %v272 = vmul.f32 %v271, %v265
        %v273 = vmul.f32 %v272, %v265
        %v274 = vadd.f32 %v265, %v273
        %v275 = vmul.f32 %v274, 0.7978846
        %v276 = vtanh.pop %v275
        %v277 = vadd.f32 %v276, 1.0
        %v278 = vmul.f32 %v270, %v277
        %v279 = vpack.c.bf16 %v278, %v278
        %280 = vst [vmem:[%s200] sm:$0xf] %v279
        %s281 = sand.u32 %s97, 1
        %s282 = scalar_lea.sflag [#allocation4], %s281
        %s283 = sand.u32 %s97, 1
        %s284 = smul.addr %s283, 4
        %s285 = scalar_lea.vmem [#allocation7], %s284
        // Predicated region
        $region41: #{tpu_custom_call.1} parent=31 // pred_check
          %p286 = pneg %p107
        $region42: #{tpu_custom_call.1} parent=31 // pred_check_branch
          %288 = sbr.rel (%p286) target = $region44
        $region43: #{tpu_custom_call.1} parent=31 // pred_region
          %s290 = ssub.s32 64, 64
          %291 = vsyncadd %s282, %s290
          %s292 = smul.addr %s21, 64
          %s293 = scalar_lea.hbm %s3, %s292
          %s295 = sshll.u32 %s285, 4
          %s296 = int_to_ptr.vmem [resolvable:$true] %s295
          %298 = dma.vmem_to_hbm [thread:$0]  %s296, 64, %s293, %s282
        $region44: #{tpu_custom_call.1} parent=31 // pred_fallthru
          _
      $region32: #{tpu_custom_call.1} parent=5 // pred_fallthru
        _
      %p299 = scmp.le.s32.totalorder 2, %s16
      // Predicated region
      $region45: #{tpu_custom_call.1} parent=5 // pred_check
        %p300 = pneg %p299
      $region46: #{tpu_custom_call.1} parent=5 // pred_check_branch
        %302 = sbr.rel (%p300) target = $region48
      $region47: #{tpu_custom_call.1} parent=5 // pred_region
        %s303 = ssub.s32 %s16, 2
        // Predicated region
        $region49: #{tpu_custom_call.1} parent=47 // pred_check
          %p304 = pneg %p113
        $region50: #{tpu_custom_call.1} parent=47 // pred_check_branch
          %306 = sbr.rel (%p304) target = $region52
        $region51: #{tpu_custom_call.1} parent=47 // pred_region
          %s307 = sand.u32 %s98, 1
          %s308 = scalar_lea.sflag [#allocation4], %s307
          %s309 = sand.u32 %s98, 1
          %s310 = smul.addr %s309, 4
          %s311 = scalar_lea.vmem [#allocation7], %s310
          %312 = dma.done %s308, 64
        $region52: #{tpu_custom_call.1} parent=47 // pred_fallthru
          _
      $region48: #{tpu_custom_call.1} parent=5 // pred_fallthru
        _
    $region6: #{tpu_custom_call.1} parent=1 // loop_footer
      %s20 = sadd.s32 1, %s16
    $region7: #{tpu_custom_call.1} parent=1 // loop_footer_branch
      %15 = sbr.rel target = $region3
    $region8: #{tpu_custom_call.1} parent=1 // loop_exit
      _
    %313 = vsyncpa [#allocation3], 1
    %s314 = scalar_lea.sflag [#allocation3], 1
    %315 = vsyncpa %s314, 1
    %316 = vsyncpa [#allocation6], 1
    %317 = vsyncpa [#allocation4], 1
    %s318 = scalar_lea.sflag [#allocation4], 1
    %319 = vsyncpa %s318, 1

</llo_original>
